<compile_context>
chip_gen: v7x
topology: tpu7x:2x2x1
jax: 0.10.0
libtpu: 0.0.40
codegen_flags: <defaults>
</compile_context>

<pallas_src>
import functools

import jax
import jax.numpy as jnp
from jax.experimental import pallas as pl
from jax.experimental.pallas import tpu as pltpu


def _act_dtype():
    """bf16 hidden activation/tanh on chips with a bf16 EUP (v6e/v7x), else f32."""
    try:
        kind = jax.devices()[0].device_kind.lower()
    except Exception:  # pragma: no cover - be permissive if query fails
        return jnp.bfloat16
    for tag in ("v2", "v3", "v4", "v5"):
        if tag in kind:
            return jnp.float32
    return jnp.bfloat16


def _mtl_kernel(x_ref, ws_ref, bs_ref, whT_ref, bh_ref, out_ref, *, act_dtype):
    # Trunk: h = x @ Ws + bs -> (tile_n, hidden) f32.  x cast bf16 on the VPU,
    # bf16 x bf16 MXU matmul with f32 accumulation, lane-aligned bias broadcast.
    xb = x_ref[...].astype(jnp.bfloat16)                       # (tile_n, in_dim)
    h = (
        jnp.dot(xb, ws_ref[...], preferred_element_type=jnp.float32)
        + bs_ref[...]
    )                                                           # (tile_n, hidden)
    # Transpose once on the XLU so everything downstream is lane-dense.
    hT = jnp.transpose(h)                                       # (hidden, tile_n)
    # tanh runs on the EUP; bf16 on v6e/v7x doubles its throughput.
    aT = jnp.tanh(hT.astype(act_dtype))                         # (hidden, tile_n)
    # Fused heads: z = Wh^T @ a + bh -> (2, tile_n), lane-dense.
    z = (
        jnp.dot(whT_ref[...].astype(act_dtype), aT,
                preferred_element_type=jnp.float32)
        + bh_ref[...]
    )
    # sigmoid(z) = 1 / (1 + exp(-z)); approx reciprocal uses the EUP slot.
    out_ref[...] = pl.reciprocal(1.0 + jnp.exp(-z), approx=True)


def fully_shared_mtl(x, ws, bs, w1, b1, w2, b2, *, tile_n_max=8192):
    """x: (..., in_dim) -> (out1, out2), each (N, 1) with N = prod(leading dims).

    ws: (in_dim, hidden), bs: (hidden,), w1/w2: (hidden, 1), b1/b2: (1,).
    Matches: a = tanh(x @ ws + bs); out_i = sigmoid(a @ w_i + b_i).
    """
    in_dim, hidden = ws.shape
    x2d = x.reshape(-1, in_dim).astype(jnp.float32)
    n = x2d.shape[0]

    # Tile size: always a multiple of 128 lanes (the (8,128)/full-dim rule),
    # capped by tile_n_max and by the (rounded-up) problem size.
    tile_n_cap = max(128, (int(tile_n_max) // 128) * 128)
    n_rounded = ((n + 127) // 128) * 128
    tile_n = min(tile_n_cap, n_rounded)
    # Prefer >= 2 grid steps when N allows it so both v7x TensorCores get work.
    if tile_n == n_rounded and n_rounded >= 256:
        tile_n = ((n_rounded // 2 + 127) // 128) * 128
    num_tiles = -(-n // tile_n)
    n_pad = num_tiles * tile_n

    # Natural (N, in_dim) layout; only pad rows if N is not a tile multiple.
    x_in = x2d
    if n_pad != n:
        x_in = jnp.pad(x2d, ((0, n_pad - n), (0, 0)))

    act_dtype = _act_dtype()

    # Trunk weight bf16 (MXU input), bias as a (1, hidden) row (lane-aligned add).
    ws_b = ws.astype(jnp.bfloat16)                               # (in_dim, hidden)
    bs_row = bs.reshape(1, hidden).astype(jnp.float32)           # (1, hidden)

    # Fused heads: Wh^T (2, hidden) bf16, bh (2, 1) f32.
    whT = jnp.transpose(jnp.concatenate([w1, w2], axis=1)).astype(jnp.bfloat16)
    bh_col = jnp.concatenate([b1, b2]).reshape(2, 1).astype(jnp.float32)

    kernel = functools.partial(_mtl_kernel, act_dtype=act_dtype)

    out = pl.pallas_call(
        kernel,
        out_shape=jax.ShapeDtypeStruct((2, n_pad), jnp.float32),
        grid=(num_tiles,),
        in_specs=[
            pl.BlockSpec((tile_n, in_dim), lambda i: (i, 0)),    # x tile (natural)
            pl.BlockSpec((in_dim, hidden), lambda i: (0, 0)),    # Ws (resident)
            pl.BlockSpec((1, hidden), lambda i: (0, 0)),         # bs
            pl.BlockSpec((2, hidden), lambda i: (0, 0)),         # Wh^T (fused heads)
            pl.BlockSpec((2, 1), lambda i: (0, 0)),              # bh
        ],
        out_specs=pl.BlockSpec((2, tile_n), lambda i: (0, i)),
        compiler_params=pltpu.CompilerParams(
            dimension_semantics=("parallel",),
            vmem_limit_bytes=32 * 1024 * 1024,
        ),
    )(x_in, ws_b, bs_row, whT, bh_col)

    out1 = out[0, :n].reshape(n, 1)
    out2 = out[1, :n].reshape(n, 1)
    return out1, out2


def init_params(key, in_dim=15, hidden=128, out_dim=1):
    k1, k2, k3, k4, k5, k6 = jax.random.split(key, 6)
    # deterministic "Kaiming-uniform-ish" init (synthetic, not a checkpoint load)
    ws = jax.random.uniform(k1, (in_dim, hidden), jnp.float32, -0.25, 0.25)
    bs = jax.random.uniform(k2, (hidden,), jnp.float32, -0.25, 0.25)
    w1 = jax.random.uniform(k3, (hidden, out_dim), jnp.float32, -0.1, 0.1)
    b1 = jax.random.uniform(k4, (out_dim,), jnp.float32, -0.1, 0.1)
    w2 = jax.random.uniform(k5, (hidden, out_dim), jnp.float32, -0.1, 0.1)
    b2 = jax.random.uniform(k6, (out_dim,), jnp.float32, -0.1, 0.1)
    return ws, bs, w1, b1, w2, b2


if __name__ == "__main__":
    key = jax.random.PRNGKey(0)
    kx, kp = jax.random.split(key)

    in_dim, hidden = 15, 128  # module default hidden_unit=128
    # small input: batch=2, seq=4, feature=15  -> reshaped to (8, 15) inside
    x = jax.random.normal(kx, (2, 4, in_dim), dtype=jnp.float32)
    params = init_params(kp, in_dim=in_dim, hidden=hidden, out_dim=1)

    out1, out2 = fully_shared_mtl(x, *params)
    jax.block_until_ready((out1, out2))

    # Reference in plain JAX, mirroring the kernel's precision choices (bf16 MXU
    # inputs, act-dtype tanh, bf16 head weights) so only accumulation order /
    # approx-reciprocal / EUP-vs-XLA tanh differ.
    ws, bs, w1, b1, w2, b2 = params
    act = _act_dtype()
    x2d = x.reshape(-1, in_dim)
    xb = x2d.astype(jnp.bfloat16).astype(jnp.float32)
    wsb = ws.astype(jnp.bfloat16).astype(jnp.float32)
    h_ref = xb @ wsb + bs
    a_ref = jnp.tanh(h_ref.astype(act)).astype(jnp.float32)
    whb = jnp.concatenate([w1, w2], axis=1).astype(jnp.bfloat16).astype(jnp.float32)
    z_ref = a_ref @ whb + jnp.concatenate([b1, b2]).reshape(1, 2)
    r1 = jax.nn.sigmoid(z_ref[:, 0:1])
    r2 = jax.nn.sigmoid(z_ref[:, 1:2])

    assert out1.shape == (x2d.shape[0], 1) and out2.shape == (x2d.shape[0], 1)
    assert jnp.allclose(out1, r1, atol=2.5e-3), "head1 mismatch"
    assert jnp.allclose(out2, r2, atol=2.5e-3), "head2 mismatch"

    print("KERNEL_OK")
</pallas_src>

<mosaic_0001>
module attributes {stable_mosaic.version = 11 : i64} {
  func.func @_mtl_kernel(%arg0: i32, %arg1: memref<128x15xf32, #tpu.memory_space<vmem>>, %arg2: memref<15x128xbf16, #tpu.memory_space<vmem>>, %arg3: memref<1x128xf32, #tpu.memory_space<vmem>>, %arg4: memref<2x128xbf16, #tpu.memory_space<vmem>>, %arg5: memref<2x1xf32, #tpu.memory_space<vmem>>, %arg6: memref<2x128xf32, #tpu.memory_space<vmem>>) attributes {dimension_semantics = [#tpu.dimension_semantics<parallel>], iteration_bounds = array<i64: 1>, scalar_prefetch = 0 : i64, scratch_operands = 0 : i64, tpu.core_type = #tpu.core_type<tc>, window_params = [{transform_indices = @transform_0, window_bounds = array<i64: 128, 15>}, {pipeline_mode = #tpu.pipeline_mode<synchronous>, transform_indices = @transform_1, window_bounds = array<i64: 15, 128>}, {pipeline_mode = #tpu.pipeline_mode<synchronous>, transform_indices = @transform_2, window_bounds = array<i64: 1, 128>}, {pipeline_mode = #tpu.pipeline_mode<synchronous>, transform_indices = @transform_3, window_bounds = array<i64: 2, 128>}, {pipeline_mode = #tpu.pipeline_mode<synchronous>, transform_indices = @transform_4, window_bounds = array<i64: 2, 1>}, {transform_indices = @transform_5, window_bounds = array<i64: 2, 128>}]} {
    %c0 = arith.constant 0 : index
    %c0_0 = arith.constant 0 : index
    %0 = vector.load %arg1[%c0, %c0_0] : memref<128x15xf32, #tpu.memory_space<vmem>>, vector<128x15xf32>
    %1 = arith.truncf %0 : vector<128x15xf32> to vector<128x15xbf16>
    %c0_1 = arith.constant 0 : index
    %c0_2 = arith.constant 0 : index
    %2 = vector.load %arg2[%c0_1, %c0_2] : memref<15x128xbf16, #tpu.memory_space<vmem>>, vector<15x128xbf16>
    %cst = arith.constant dense<0.000000e+00> : vector<128x128xf32>
    %3 = tpu.matmul %1, %2, %cst {dimension_numbers = #tpu.dot_dimension_numbers<[1], [0], [0], [1], [0, 0, 1, 1], [], []>} : vector<128x15xbf16>, vector<15x128xbf16>, vector<128x128xf32> -> vector<128x128xf32>
    %c0_3 = arith.constant 0 : index
    %c0_4 = arith.constant 0 : index
    %4 = vector.load %arg3[%c0_3, %c0_4] : memref<1x128xf32, #tpu.memory_space<vmem>>, vector<1x128xf32>
    %5 = vector.broadcast %4 : vector<1x128xf32> to vector<128x128xf32>
    %6 = arith.addf %3, %5 : vector<128x128xf32>
    %7 = tpu.transpose %6, [1, 0] : vector<128x128xf32> -> vector<128x128xf32>
    %8 = arith.truncf %7 : vector<128x128xf32> to vector<128x128xbf16>
    %9 = math.tanh %8 : vector<128x128xbf16>
    %c0_5 = arith.constant 0 : index
    %c0_6 = arith.constant 0 : index
    %10 = vector.load %arg4[%c0_5, %c0_6] : memref<2x128xbf16, #tpu.memory_space<vmem>>, vector<2x128xbf16>
    %cst_7 = arith.constant dense<0.000000e+00> : vector<2x128xf32>
    %11 = tpu.matmul %10, %9, %cst_7 {dimension_numbers = #tpu.dot_dimension_numbers<[1], [0], [0], [1], [0, 0, 1, 1], [], []>} : vector<2x128xbf16>, vector<128x128xbf16>, vector<2x128xf32> -> vector<2x128xf32>
    %c0_8 = arith.constant 0 : index
    %c0_9 = arith.constant 0 : index
    %12 = vector.load %arg5[%c0_8, %c0_9] : memref<2x1xf32, #tpu.memory_space<vmem>>, vector<2x1xf32>
    %13 = vector.broadcast %12 : vector<2x1xf32> to vector<2x128xf32>
    %14 = arith.addf %11, %13 : vector<2x128xf32>
    %cst_10 = arith.constant 0.000000e+00 : f32
    %15 = vector.broadcast %cst_10 : f32 to vector<2x128xf32>
    %16 = arith.subf %15, %14 : vector<2x128xf32>
    %17 = math.exp %16 : vector<2x128xf32>
    %cst_11 = arith.constant 1.000000e+00 : f32
    %18 = vector.broadcast %cst_11 : f32 to vector<2x128xf32>
    %19 = arith.addf %18, %17 : vector<2x128xf32>
    %20 = tpu.reciprocal %19 {approx = true} : vector<2x128xf32> -> vector<2x128xf32>
    %c0_12 = arith.constant 0 : index
    %c0_13 = arith.constant 0 : index
    %21 = vector.load %arg6[%c0_12, %c0_13] : memref<2x128xf32, #tpu.memory_space<vmem>>, vector<2x128xf32>
    tpu.vector_store %arg6[%c0_12, %c0_13], %20 {strides = array<i32>} : memref<2x128xf32, #tpu.memory_space<vmem>>, vector<2x128xf32>,
    return
  }
  func.func @transform_0(%arg0: i32) -> (i32, i32) {
    %c0_i32 = arith.constant 0 : i32
    %c0_i32_0 = arith.constant 0 : i32
    return %arg0, %c0_i32 : i32, i32
  }
  func.func @transform_1(%arg0: i32) -> (i32, i32) {
    %c0_i32 = arith.constant 0 : i32
    %c0_i32_0 = arith.constant 0 : i32
    %c0_i32_1 = arith.constant 0 : i32
    return %c0_i32, %c0_i32_0 : i32, i32
  }
  func.func @transform_2(%arg0: i32) -> (i32, i32) {
    %c0_i32 = arith.constant 0 : i32
    %c0_i32_0 = arith.constant 0 : i32
    %c0_i32_1 = arith.constant 0 : i32
    return %c0_i32, %c0_i32_0 : i32, i32
  }
  func.func @transform_3(%arg0: i32) -> (i32, i32) {
    %c0_i32 = arith.constant 0 : i32
    %c0_i32_0 = arith.constant 0 : i32
    %c0_i32_1 = arith.constant 0 : i32
    return %c0_i32, %c0_i32_0 : i32, i32
  }
  func.func @transform_4(%arg0: i32) -> (i32, i32) {
    %c0_i32 = arith.constant 0 : i32
    %c0_i32_0 = arith.constant 0 : i32
    %c0_i32_1 = arith.constant 0 : i32
    return %c0_i32, %c0_i32_0 : i32, i32
  }
  func.func @transform_5(%arg0: i32) -> (i32, i32) {
    %c0_i32 = arith.constant 0 : i32
    %c0_i32_0 = arith.constant 0 : i32
    return %c0_i32, %arg0 : i32, i32
  }
}

</mosaic_0001>

<llo_original>
// kernel: tpu_custom_call.1
$region0: #{tpu_custom_call.1}
  #allocation0 [shape = 'u32[]', space=smem, size = 0x4, offset = 0x4, fixed_abs, tag = 'smem constant byte address 0x4 - core index']
  #allocation1 [shape = 'u32[144,128]{1,0:T(1,128)}', space=vmem, size = 0x12000, scoped, tag = 'internal scratch']
  %s0 = inlined_call_operand.vmem [shape: f32[128,15], index: 0, kind: input, shape index: {}]
  %s1 = inlined_call_operand.vmem [shape: bf16[15,128], index: 1, kind: input, shape index: {}]
  %s2 = inlined_call_operand.vmem [shape: f32[1,128], index: 2, kind: input, shape index: {}]
  %s3 = inlined_call_operand.vmem [shape: bf16[2,128], index: 3, kind: input, shape index: {}]
  %s4 = inlined_call_operand.vmem [shape: f32[2,1], index: 4, kind: input, shape index: {}]
  %s5 = inlined_call_operand.hbm [shape: f32[2,128], index: 5, kind: output, shape index: {}]
  %s6 = sld [smem:[#allocation0]]
  $region30: #{tpu_custom_call.1} parent=0
    _
  %s8 = ssub.s32 1, %s6
  %s9 = scalar_select 0, %s8, %s6
  $region1: #{tpu_custom_call.1} parent=0
    #allocation2 [shape = 'u8[1024]{0}', space=vmem, size = 0x400, scoped, tag = 'output window, operand 0, single buffered']
    #allocation3 [shape = 's32[1]{0}', space=sflag, size = 0x4, scoped, tag = 'scoped memory for tpu_custom_call.1']
    %10 = vsyncpa [#allocation3], 0
    // Predicated region
    $region2: #{tpu_custom_call.1} parent=1 // pred_check
      _
    $region3: #{tpu_custom_call.1} parent=1 // pred_check_branch
      %12 = sbr.rel (0) target = $region5
    $region4: #{tpu_custom_call.1} parent=1 // pred_region
      _
    $region5: #{tpu_custom_call.1} parent=1 // pred_fallthru
      _
    // Predicated region
    $region6: #{tpu_custom_call.1} parent=1 // pred_check
      _
    $region7: #{tpu_custom_call.1} parent=1 // pred_check_branch
      %14 = sbr.rel (0) target = $region9
    $region8: #{tpu_custom_call.1} parent=1 // pred_region
      _
    $region9: #{tpu_custom_call.1} parent=1 // pred_fallthru
      _
    // Predicated region
    $region10: #{tpu_custom_call.1} parent=1 // pred_check
      _
    $region11: #{tpu_custom_call.1} parent=1 // pred_check_branch
      %16 = sbr.rel (0) target = $region13
    $region12: #{tpu_custom_call.1} parent=1 // pred_region
      _
    $region13: #{tpu_custom_call.1} parent=1 // pred_fallthru
      _
    // Predicated region
    $region14: #{tpu_custom_call.1} parent=1 // pred_check
      _
    $region15: #{tpu_custom_call.1} parent=1 // pred_check_branch
      %18 = sbr.rel (0) target = $region17
    $region16: #{tpu_custom_call.1} parent=1 // pred_region
      _
    $region17: #{tpu_custom_call.1} parent=1 // pred_fallthru
      _
    // Predicated region
    $region18: #{tpu_custom_call.1} parent=1 // pred_check
      _
    $region19: #{tpu_custom_call.1} parent=1 // pred_check_branch
      %20 = sbr.rel (0) target = $region21
    $region20: #{tpu_custom_call.1} parent=1 // pred_region
      _
    $region21: #{tpu_custom_call.1} parent=1 // pred_fallthru
      _
    %v22 = vld [vmem:[%s0] sm:$0xff]
    %v23 = vld [vmem:[%s0 + $0x8] sm:$0xff]
    %v24 = vld [vmem:[%s0 + $0x10] sm:$0xff]
    %v25 = vld [vmem:[%s0 + $0x18] sm:$0xff]
    %v26 = vld [vmem:[%s0 + $0x20] sm:$0xff]
    %v27 = vld [vmem:[%s0 + $0x28] sm:$0xff]
    %v28 = vld [vmem:[%s0 + $0x30] sm:$0xff]
    %v29 = vld [vmem:[%s0 + $0x38] sm:$0xff]
    %v30 = vld [vmem:[%s0 + $0x40] sm:$0xff]
    %v31 = vld [vmem:[%s0 + $0x48] sm:$0xff]
    %v32 = vld [vmem:[%s0 + $0x50] sm:$0xff]
    %v33 = vld [vmem:[%s0 + $0x58] sm:$0xff]
    %v34 = vld [vmem:[%s0 + $0x60] sm:$0xff]
    %v35 = vld [vmem:[%s0 + $0x68] sm:$0xff]
    %v36 = vld [vmem:[%s0 + $0x70] sm:$0xff]
    %v37 = vld [vmem:[%s0 + $0x78] sm:$0xff]
    %v38 = vpack.c.bf16 %v23, %v22
    %v39 = vpack.c.bf16 %v25, %v24
    %v40 = vpack.c.bf16 %v27, %v26
    %v41 = vpack.c.bf16 %v29, %v28
    %v42 = vpack.c.bf16 %v31, %v30
    %v43 = vpack.c.bf16 %v33, %v32
    %v44 = vpack.c.bf16 %v35, %v34
    %v45 = vpack.c.bf16 %v37, %v36
    %v46 = vld [vmem:[%s1] sm:$0xf]
    %v47 = vld [vmem:[%s1 + $0x4] sm:$0xf]
    %v48 = vld [vmem:[%s2] sm:$0x1]
    %v50 = vlaneseq
    %v51 = vshrl.u32 %v50, 7
    %v52 = vsub.s32 0, %v51
    %v53 = vrot.slane %v48, %v52
    %v57 = vunpack.c.l.b16 %v46
    %v58 = vunpack.c.l.b16 %v47
    %v59 = vpack.c.b16 %v58, %v57
    %vm60 = vcmask 121856
    %v62 = vsel %vm60, %v38, 0
    %v65 = vsel %vm60, %v39, 0
    %v68 = vsel %vm60, %v40, 0
    %v71 = vsel %vm60, %v41, 0
    %v74 = vsel %vm60, %v42, 0
    %v77 = vsel %vm60, %v43, 0
    %v80 = vsel %vm60, %v44, 0
    %v83 = vsel %vm60, %v45, 0
    %vm85 = vcmask 1046528
    %vm86 = vcmask 1047552
    %v87 = vsel %vm85, 4294967295, 65535
    %v88 = vsel %vm86, %v87, 0
    %v90 = vand.u32 %v59, %v88
    %92 = vmatprep.subr.bf16.mxu0 0
    %93 = vmatpush1.bf16.msra.mxu0 %v90
    %94 = vmatprep.subr.bf16.mxu0 0
    %95 = vmatpush1.bf16.msra.mxu0 0
    %96 = vmatprep.subr.bf16.mxu0 0
    %97 = vmatpush1.bf16.msra.mxu0 0
    %98 = vmatprep.subr.bf16.mxu0 0
    %99 = vmatpush1.bf16.msra.mxu0 0
    %100 = vmatprep.subr.bf16.mxu0 0
    %101 = vmatpush1.bf16.msra.mxu0 0
    %102 = vmatprep.subr.bf16.mxu0 0
    %103 = vmatpush1.bf16.msra.mxu0 0
    %104 = vmatprep.subr.bf16.mxu0 0
    %105 = vmatpush1.bf16.msra.mxu0 0
    %106 = vmatprep.subr.bf16.mxu0 0
    %107 = vmatpush1.bf16.msra.mxu0 0
    %108 = vmatprep.subr.bf16.mxu0 0
    %109 = vmatpush1.bf16.msra.mxu0 0
    %110 = vmatprep.subr.bf16.mxu0 0
    %111 = vmatpush1.bf16.msra.mxu0 0
    %112 = vmatprep.subr.bf16.mxu0 0
    %113 = vmatpush1.bf16.msra.mxu0 0
    %114 = vmatprep.subr.bf16.mxu0 0
    %115 = vmatpush1.bf16.msra.mxu0 0
    %116 = vmatprep.subr.bf16.mxu0 0
    %117 = vmatpush1.bf16.msra.mxu0 0
    %118 = vmatprep.subr.bf16.mxu0 0
    %119 = vmatpush1.bf16.msra.mxu0 0
    %120 = vmatprep.subr.bf16.mxu0 0
    %121 = vmatpush1.bf16.msra.mxu0 0
    %122 = vmatprep.subr.bf16.mxu0 0
    %123 = vmatpush1.bf16.msra.mxu0 0
    %124 = vmatprep.mubr.bf16.mxu0 0
    %125 = vmatmul.mubr.bf16.gmra.mrb[0].mxu0 %v62
    %v126 = vpop.f32.mrb[0].mxu0
    %v127 = vadd.f32 %v53, %v126
    %v128 = vpop.f32.mrb[0].mxu0
    %v129 = vpop.f32.mrb[0].mxu0
    %v130 = vadd.f32 %v53, %v129
    %v131 = vpop.f32.mrb[0].mxu0
    %132 = vmatprep.mubr.bf16.mxu0 0
    %133 = vmatmul.mubr.bf16.gmra.mrb[0].mxu0 %v65
    %v134 = vpop.f32.mrb[0].mxu0
    %v135 = vadd.f32 %v53, %v134
    %v136 = vpop.f32.mrb[0].mxu0
    %v137 = vpop.f32.mrb[0].mxu0
    %v138 = vadd.f32 %v53, %v137
    %v139 = vpop.f32.mrb[0].mxu0
    %140 = vmatprep.mubr.bf16.mxu0 0
    %141 = vmatmul.mubr.bf16.gmra.mrb[0].mxu0 %v68
    %v142 = vpop.f32.mrb[0].mxu0
    %v143 = vadd.f32 %v53, %v142
    %v144 = vpop.f32.mrb[0].mxu0
    %v145 = vpop.f32.mrb[0].mxu0
    %v146 = vadd.f32 %v53, %v145
    %v147 = vpop.f32.mrb[0].mxu0
    %148 = vmatprep.mubr.bf16.mxu0 0
    %149 = vmatmul.mubr.bf16.gmra.mrb[0].mxu0 %v71
    %v150 = vpop.f32.mrb[0].mxu0
    %v151 = vadd.f32 %v53, %v150
    %v152 = vpop.f32.mrb[0].mxu0
    %v153 = vpop.f32.mrb[0].mxu0
    %v154 = vadd.f32 %v53, %v153
    %v155 = vpop.f32.mrb[0].mxu0
    %156 = vmatprep.mubr.bf16.mxu0 0
    %157 = vmatmul.mubr.bf16.gmra.mrb[0].mxu0 %v74
    %v158 = vpop.f32.mrb[0].mxu0
    %v159 = vadd.f32 %v53, %v158
    %v160 = vpop.f32.mrb[0].mxu0
    %v161 = vpop.f32.mrb[0].mxu0
    %v162 = vadd.f32 %v53, %v161
    %v163 = vpop.f32.mrb[0].mxu0
    %164 = vmatprep.mubr.bf16.mxu0 0
    %165 = vmatmul.mubr.bf16.gmra.mrb[0].mxu0 %v77
    %v166 = vpop.f32.mrb[0].mxu0
    %v167 = vadd.f32 %v53, %v166
    %v168 = vpop.f32.mrb[0].mxu0
    %v169 = vpop.f32.mrb[0].mxu0
    %v170 = vadd.f32 %v53, %v169
    %v171 = vpop.f32.mrb[0].mxu0
    %172 = vmatprep.mubr.bf16.mxu0 0
    %173 = vmatmul.mubr.bf16.gmra.mrb[0].mxu0 %v80
    %v174 = vpop.f32.mrb[0].mxu0
    %v175 = vadd.f32 %v53, %v174
    %v176 = vpop.f32.mrb[0].mxu0
    %v177 = vpop.f32.mrb[0].mxu0
    %v178 = vadd.f32 %v53, %v177
    %v179 = vpop.f32.mrb[0].mxu0
    %180 = vmatprep.mubr.bf16.mxu0 0
    %181 = vmatmul.mubr.bf16.gmra.mrb[0].mxu0 %v83
    %v182 = vpop.f32.mrb[0].mxu0
    %v183 = vadd.f32 %v53, %v182
    %v184 = vpop.f32.mrb[0].mxu0
    %v185 = vpop.f32.mrb[0].mxu0
    %v186 = vadd.f32 %v53, %v185
    %v187 = vpop.f32.mrb[0].mxu0
    %188 = vdwg.mxu0
    %189 = vxpose.xlu0.b32.start [1/16] %v127, 128
    %190 = vxpose.xlu0.b32.cont [2/16] %v130, 128
    %191 = vxpose.xlu0.b32.cont [3/16] %v135, 128
    %192 = vxpose.xlu0.b32.cont [4/16] %v138, 128
    %193 = vxpose.xlu0.b32.cont [5/16] %v143, 128
    %194 = vxpose.xlu0.b32.cont [6/16] %v146, 128
    %195 = vxpose.xlu0.b32.cont [7/16] %v151, 128
    %196 = vxpose.xlu0.b32.cont [8/16] %v154, 128
    %197 = vxpose.xlu0.b32.cont [9/16] %v159, 128
    %198 = vxpose.xlu0.b32.cont [10/16] %v162, 128
    %199 = vxpose.xlu0.b32.cont [11/16] %v167, 128
    %200 = vxpose.xlu0.b32.cont [12/16] %v170, 128
    %201 = vxpose.xlu0.b32.cont [13/16] %v175, 128
    %202 = vxpose.xlu0.b32.cont [14/16] %v178, 128
    %203 = vxpose.xlu0.b32.cont [15/16] %v183, 128
    %204 = vxpose.xlu0.b32.end [16/16] %v186, 128
    %v205 = vpop.trf.xlu0
    %v206 = vpop.trf.xlu0
    %v207 = vpop.trf.xlu0
    %v208 = vpop.trf.xlu0
    %v209 = vpop.trf.xlu0
    %v210 = vpop.trf.xlu0
    %v211 = vpop.trf.xlu0
    %v212 = vpop.trf.xlu0
    %v213 = vpop.trf.xlu0
    %v214 = vpop.trf.xlu0
    %v215 = vpop.trf.xlu0
    %v216 = vpop.trf.xlu0
    %v217 = vpop.trf.xlu0
    %v218 = vpop.trf.xlu0
    %v219 = vpop.trf.xlu0
    %v220 = vpop.trf.xlu0
    %v221 = vpack.c.bf16 %v206, %v205
    %v222 = vpack.c.bf16 %v208, %v207
    %v223 = vpack.c.bf16 %v210, %v209
    %v224 = vpack.c.bf16 %v212, %v211
    %v225 = vpack.c.bf16 %v214, %v213
    %v226 = vpack.c.bf16 %v216, %v215
    %v227 = vpack.c.bf16 %v218, %v217
    %v228 = vpack.c.bf16 %v220, %v219
    %v229 = vtanh.bf16.pop %v221
    %v230 = vtanh.bf16.pop %v222
    %v231 = vtanh.bf16.pop %v223
    %v232 = vtanh.bf16.pop %v224
    %v233 = vtanh.bf16.pop %v225
    %v234 = vtanh.bf16.pop %v226
    %v235 = vtanh.bf16.pop %v227
    %v236 = vtanh.bf16.pop %v228
    %v237 = vld [vmem:[%s3] sm:$0x1]
    %v238 = vld [vmem:[%s4] sm:$0x3]
    %240 = vset.pattern.permute.xlu0 0
    %241 = vperm.xlu0 %240, %v238
    %v242 = vpop.permute.xlu0 %241
    %244 = vmatprep.subr.bf16.mxu0 0
    %245 = vmatpush1.bf16.msra.mxu0 %v229
    %246 = vmatprep.subr.bf16.mxu0 0
    %247 = vmatpush1.bf16.msra.mxu0 %v230
    %248 = vmatprep.subr.bf16.mxu0 0
    %249 = vmatpush1.bf16.msra.mxu0 %v231
    %250 = vmatprep.subr.bf16.mxu0 0
    %251 = vmatpush1.bf16.msra.mxu0 %v232
    %252 = vmatprep.subr.bf16.mxu0 0
    %253 = vmatpush1.bf16.msra.mxu0 %v233
    %254 = vmatprep.subr.bf16.mxu0 0
    %255 = vmatpush1.bf16.msra.mxu0 %v234
    %256 = vmatprep.subr.bf16.mxu0 0
    %257 = vmatpush1.bf16.msra.mxu0 %v235
    %258 = vmatprep.subr.bf16.mxu0 0
    %259 = vmatpush1.bf16.msra.mxu0 %v236
    %260 = vmatprep.subr.bf16.mxu0 0
    %261 = vmatpush1.bf16.msra.mxu0 0
    %262 = vmatprep.subr.bf16.mxu0 0
    %263 = vmatpush1.bf16.msra.mxu0 0
    %264 = vmatprep.subr.bf16.mxu0 0
    %265 = vmatpush1.bf16.msra.mxu0 0
    %266 = vmatprep.subr.bf16.mxu0 0
    %267 = vmatpush1.bf16.msra.mxu0 0
    %268 = vmatprep.subr.bf16.mxu0 0
    %269 = vmatpush1.bf16.msra.mxu0 0
    %270 = vmatprep.subr.bf16.mxu0 0
    %271 = vmatpush1.bf16.msra.mxu0 0
    %272 = vmatprep.subr.bf16.mxu0 0
    %273 = vmatpush1.bf16.msra.mxu0 0
    %274 = vmatprep.subr.bf16.mxu0 0
    %275 = vmatpush1.bf16.msra.mxu0 0
    %276 = vmatprep.mubr.bf16.mxu0 0
    %277 = vmatmul.mubr.bf16.gmra.mrb[0].mxu0 %v237
    %v278 = vpop.f32.mrb[0].mxu0
    %v279 = vadd.f32 %v242, %v278
    %v280 = vpop.f32.mrb[0].mxu0
    %v281 = vpop.f32.mrb[0].mxu0
    %v282 = vpop.f32.mrb[0].mxu0
    %283 = vdwg.mxu0
    %v284 = vsub.f32 0.0, %v279
    %v285 = vmul.f32 %v284, 1.442695
    %v286 = vpow.pop %v285
    %v287 = vadd.f32 %v286, 1.0
    %v288 = vrcp.pop %v287
    %289 = vst [vmem:[#allocation2] sm:$0x3] %v288
    // Predicated region
    $region22: #{tpu_custom_call.1} parent=1 // pred_check
      _
    $region23: #{tpu_custom_call.1} parent=1 // pred_check_branch
      %291 = sbr.rel (0) target = $region25
    $region24: #{tpu_custom_call.1} parent=1 // pred_region
      %s293 = ssub.s32 32, 32
      %294 = vsyncadd [#allocation3], %s293
      %s296 = sshll.u32 [#allocation2], 4
      %s297 = int_to_ptr.vmem [resolvable:$true] %s296
      %299 = dma.vmem_to_hbm [thread:$0]  %s297, 32, %s5, [#allocation3]
    $region25: #{tpu_custom_call.1} parent=1 // pred_fallthru
      _
    // Predicated region
    $region26: #{tpu_custom_call.1} parent=1 // pred_check
      _
    $region27: #{tpu_custom_call.1} parent=1 // pred_check_branch
      %301 = sbr.rel (0) target = $region29
    $region28: #{tpu_custom_call.1} parent=1 // pred_region
      %302 = dma.done [#allocation3], 32
    $region29: #{tpu_custom_call.1} parent=1 // pred_fallthru
      _
    %303 = vsyncpa [#allocation3], 1

</llo_original>
